<compile_context>
chip_gen: v7x
topology: tpu7x:2x2x1
jax: 0.10.0
libtpu: 0.0.40
codegen_flags: <defaults>
</compile_context>

<pallas_src>
import functools

import jax
import jax.numpy as jnp
import numpy as np
from jax import lax
from jax.experimental import pallas as pl
from jax.experimental.pallas import tpu as pltpu


def _durations_kernel(mt_ref, n_ref, out_ref, *, fps):
    """Processes a (ROWS, L_scan) input tile; each row is one utterance."""
    R, Ls = mt_ref.shape                                   # scan extent (<= out width)
    _, Lp = out_ref.shape                                  # lane-dense output width

    mt = mt_ref[...]                                       # (R, Ls) maxTime_j (f32)
    n = n_ref[...]                                         # (R, 1) valid length (i32)

    lane = lax.broadcasted_iota(jnp.int32, (R, Ls), 1)     # phoneme index j along lanes
    lane_f = lane.astype(jnp.float32)                      # cast once, reused below
    frames = jnp.floor(mt * jnp.float32(fps))              # F_j
    g = frames - lane_f                                    # G_j = F_j - j

    # Inclusive prefix max along lanes (per row) via Hillis-Steele:
    #   after k rounds m[i] = max_{i-2^k < j <= i} G_j
    m = g
    shift = 1
    while shift < Ls:                                      # unrolled at trace time
        rolled = pltpu.roll(m, shift=shift, axis=1)        # rolled[i] = m[i - shift]
        m = jnp.where(lane >= shift, jnp.maximum(m, rolled), m)
        shift *= 2

    # S_i = i + max(1, M_i);  S_{-1} = 0;  d_i = S_i - S_{i-1}  (always >= 1)
    s = lane_f + jnp.maximum(m, jnp.float32(1.0))
    s_prev = jnp.where(lane == 0, jnp.float32(0.0),
                       pltpu.roll(s, shift=1, axis=1))
    d = s - s_prev
    log_d = jnp.log2(d)                                    # rides the EUP slot

    # Zero out positions past the number of alignments (np.clip in the
    # reference is a discarded no-op, so no clipping here).
    vals = jnp.where(lane < n, log_d, jnp.float32(0.0))
    if Lp == Ls:
        out_ref[...] = vals
    else:
        out_ref[:, :Ls] = vals                             # static, lane-aligned slice
        out_ref[:, Ls:] = jnp.zeros((R, Lp - Ls), jnp.float32)


def _round_up(x, m):
    return ((x + m - 1) // m) * m


def _choose_rows(batch, l_scan, l_pad):
    """Rows per grid step: big tiles, but VMEM-safe and megacore-friendly."""
    per_row_bytes = (l_scan + l_pad + 8) * 4
    vmem_budget = 12 * 1024 * 1024          # fits v5e's 16 MiB scoped default
    rows = (vmem_budget // (2 * per_row_bytes)) // 8 * 8   # /2: double buffering
    rows = max(8, min(1024, rows))
    b_pad8 = _round_up(max(batch, 1), 8)
    if b_pad8 >= 16:
        # keep >= 2 grid steps so the "parallel" axis can shard across v7x's 2 TCs
        rows = min(rows, _round_up(-(-b_pad8 // 2), 8))
    rows = min(rows, b_pad8)
    return max(8, rows)


@functools.partial(jax.jit, static_argnames=("fps", "output_length"))
def _extract_durations(max_times, lengths, *, fps, output_length):
    """max_times: (B, L_in) f32 (padded arbitrarily past lengths); lengths: (B,) i32."""
    B, L_in = max_times.shape
    L_pad = _round_up(max(output_length, 128), 128)         # lane-dense output width
    L_scan = min(L_pad, _round_up(max(L_in, 128), 128))      # scan only the real extent
    rows = _choose_rows(B, L_scan, L_pad)
    B_pad = _round_up(B, rows)

    mt = max_times.astype(jnp.float32)
    if L_in > L_scan:                                        # more phonemes than output slots
        mt = mt[:, :L_scan]
    mt = jnp.pad(mt, ((0, B_pad - B), (0, L_scan - mt.shape[1])))
    n = jnp.pad(lengths.astype(jnp.int32), (0, B_pad - B)).reshape(B_pad, 1)

    kernel = functools.partial(_durations_kernel, fps=float(fps))
    out = pl.pallas_call(
        kernel,
        out_shape=jax.ShapeDtypeStruct((B_pad, L_pad), jnp.float32),
        grid=(B_pad // rows,),
        in_specs=[
            pl.BlockSpec((rows, L_scan), lambda i: (i, 0)),   # max_times tile
            pl.BlockSpec((rows, 1), lambda i: (i, 0)),        # per-row lengths
        ],
        out_specs=pl.BlockSpec((rows, L_pad), lambda i: (i, 0)),
        compiler_params=pltpu.CompilerParams(
            dimension_semantics=("parallel",)),
    )(mt, n)
    return out[:B, :output_length]


class PhonemeDurationsExtractingTransform:
    """JAX/Pallas port of the PyTorch transform.

    textgrid.Interval parsing has no device analogue; the call takes the array
    of `alignment.maxTime` values instead.  Accepts either a single utterance
    (1-D array of n end-times) or a padded batch (B, L) plus per-row lengths.
    """

    def __init__(self, output_length: int, output_spectrogram_length: int,
                 output_audio_length: float):
        self._output_length = int(output_length)
        self._output_frames_per_second = (
            float(output_spectrogram_length) / float(output_audio_length))

    def __call__(self, max_times, lengths=None):
        max_times = jnp.asarray(max_times, jnp.float32)
        if max_times.ndim == 1:
            lengths = jnp.array([max_times.shape[0]], jnp.int32)
            out = _extract_durations(
                max_times[None, :], lengths,
                fps=self._output_frames_per_second,
                output_length=self._output_length)
            return out[0]
        if lengths is None:
            lengths = jnp.full((max_times.shape[0],), max_times.shape[1], jnp.int32)
        return _extract_durations(
            max_times, jnp.asarray(lengths, jnp.int32),
            fps=self._output_frames_per_second,
            output_length=self._output_length)


def _reference(max_times, output_length, fps):
    """Numpy mirror of the original PyTorch forward.

    frames are computed in float32 to match the kernel exactly; the original
    accumulates in float64 but the intermediate values are small integers, so
    the results coincide (documented divergence otherwise).
    """
    durations = np.zeros(output_length)
    for idx, t in enumerate(max_times):
        frames_up_now = np.floor(np.float32(t) * np.float32(fps))
        duration = frames_up_now - np.sum(durations)
        durations[idx] = duration if duration > 1 else 1.0
    durations[:len(max_times)] = np.log2(durations[:len(max_times)])
    # np.clip(...) in the original discards its result -> no-op
    durations[len(max_times):] = 0.0
    return durations.astype(np.float32)


if __name__ == "__main__":
    key = jax.random.PRNGKey(0)
    k1, k2, k3 = jax.random.split(key, 3)

    # ---- Case A: short utterances, output_length < 128 lanes -------------
    output_length = 16
    output_spectrogram_length = 80
    output_audio_length = 2.0
    fps = output_spectrogram_length / output_audio_length
    transform = PhonemeDurationsExtractingTransform(
        output_length, output_spectrogram_length, output_audio_length)

    n1, n2 = 10, 14
    gaps1 = jax.random.uniform(k1, (n1,), minval=0.05, maxval=0.4, dtype=jnp.float32)
    gaps2 = jax.random.uniform(k2, (n2,), minval=0.05, maxval=0.4, dtype=jnp.float32)
    mt1 = jnp.cumsum(gaps1)   # strictly increasing phoneme end times (seconds)
    mt2 = jnp.cumsum(gaps2)

    out1 = jax.block_until_ready(transform(mt1))            # single-utterance call

    L_in = max(n1, n2)                                       # batched call
    batch = jnp.zeros((2, L_in), jnp.float32)
    batch = batch.at[0, :n1].set(mt1).at[1, :n2].set(mt2)
    lengths = jnp.array([n1, n2], jnp.int32)
    out_b = jax.block_until_ready(transform(batch, lengths))

    ref1 = _reference(np.asarray(mt1), output_length, fps)
    ref2 = _reference(np.asarray(mt2), output_length, fps)

    assert out1.shape == (output_length,) and out1.dtype == jnp.float32
    assert out_b.shape == (2, output_length) and out_b.dtype == jnp.float32
    assert np.allclose(np.asarray(out1), ref1, atol=1e-5), (np.asarray(out1), ref1)
    assert np.allclose(np.asarray(out_b[0]), ref1, atol=1e-5)
    assert np.allclose(np.asarray(out_b[1]), ref2, atol=1e-5)

    # ---- Case B: >128 phonemes (cross-vreg roll) and bounded scan --------
    output_length_b = 300            # L_pad=384 lanes, scan bounded to 256
    spec_len_b, audio_len_b = 1500, 30.0
    fps_b = spec_len_b / audio_len_b
    transform_b = PhonemeDurationsExtractingTransform(
        output_length_b, spec_len_b, audio_len_b)

    n3 = 150
    gaps3 = jax.random.uniform(k3, (n3,), minval=0.02, maxval=0.15, dtype=jnp.float32)
    mt3 = jnp.cumsum(gaps3)
    out3 = jax.block_until_ready(transform_b(mt3))
    ref3 = _reference(np.asarray(mt3), output_length_b, fps_b)

    assert out3.shape == (output_length_b,) and out3.dtype == jnp.float32
    assert np.allclose(np.asarray(out3), ref3, atol=1e-5), (np.asarray(out3), ref3)

    print("KERNEL_OK")
</pallas_src>

<mosaic_0001>
module attributes {stable_mosaic.version = 11 : i64} {
  func.func @_durations_kernel(%arg0: i32, %arg1: memref<8x128xf32, #tpu.memory_space<vmem>>, %arg2: memref<8x1xi32, #tpu.memory_space<vmem>>, %arg3: memref<8x128xf32, #tpu.memory_space<vmem>>) attributes {dimension_semantics = [#tpu.dimension_semantics<parallel>], iteration_bounds = array<i64: 1>, scalar_prefetch = 0 : i64, scratch_operands = 0 : i64, tpu.core_type = #tpu.core_type<tc>, window_params = [{transform_indices = @transform_0, window_bounds = array<i64: 8, 128>}, {transform_indices = @transform_1, window_bounds = array<i64: 8, 1>}, {transform_indices = @transform_2, window_bounds = array<i64: 8, 128>}]} {
    %c0 = arith.constant 0 : index
    %c0_0 = arith.constant 0 : index
    %0 = vector.load %arg1[%c0, %c0_0] : memref<8x128xf32, #tpu.memory_space<vmem>>, vector<8x128xf32>
    %c0_1 = arith.constant 0 : index
    %c0_2 = arith.constant 0 : index
    %1 = vector.load %arg2[%c0_1, %c0_2] : memref<8x1xi32, #tpu.memory_space<vmem>>, vector<8x1xi32>
    %2 = tpu.iota {dimensions = array<i32: 1>} : vector<8x128xi32>
    %3 = arith.sitofp %2 : vector<8x128xi32> to vector<8x128xf32>
    %cst = arith.constant 4.000000e+01 : f32
    %4 = vector.broadcast %cst : f32 to vector<8x128xf32>
    %5 = arith.mulf %0, %4 : vector<8x128xf32>
    %6 = math.floor %5 : vector<8x128xf32>
    %7 = arith.subf %6, %3 : vector<8x128xf32>
    %c1_i32 = arith.constant 1 : i32
    %8 = tpu.dynamic_rotate %7 by %c1_i32 dim 1 : vector<8x128xf32>, i32 -> vector<8x128xf32>
    %c1_i32_3 = arith.constant 1 : i32
    %9 = vector.broadcast %c1_i32_3 : i32 to vector<8x128xi32>
    %10 = arith.cmpi sge, %2, %9 : vector<8x128xi32>
    %11 = arith.maximumf %7, %8 : vector<8x128xf32>
    %12 = arith.select %10, %11, %7 : vector<8x128xi1>, vector<8x128xf32>
    %c2_i32 = arith.constant 2 : i32
    %13 = tpu.dynamic_rotate %12 by %c2_i32 dim 1 : vector<8x128xf32>, i32 -> vector<8x128xf32>
    %c2_i32_4 = arith.constant 2 : i32
    %14 = vector.broadcast %c2_i32_4 : i32 to vector<8x128xi32>
    %15 = arith.cmpi sge, %2, %14 : vector<8x128xi32>
    %16 = arith.maximumf %12, %13 : vector<8x128xf32>
    %17 = arith.select %15, %16, %12 : vector<8x128xi1>, vector<8x128xf32>
    %c4_i32 = arith.constant 4 : i32
    %18 = tpu.dynamic_rotate %17 by %c4_i32 dim 1 : vector<8x128xf32>, i32 -> vector<8x128xf32>
    %c4_i32_5 = arith.constant 4 : i32
    %19 = vector.broadcast %c4_i32_5 : i32 to vector<8x128xi32>
    %20 = arith.cmpi sge, %2, %19 : vector<8x128xi32>
    %21 = arith.maximumf %17, %18 : vector<8x128xf32>
    %22 = arith.select %20, %21, %17 : vector<8x128xi1>, vector<8x128xf32>
    %c8_i32 = arith.constant 8 : i32
    %23 = tpu.dynamic_rotate %22 by %c8_i32 dim 1 : vector<8x128xf32>, i32 -> vector<8x128xf32>
    %c8_i32_6 = arith.constant 8 : i32
    %24 = vector.broadcast %c8_i32_6 : i32 to vector<8x128xi32>
    %25 = arith.cmpi sge, %2, %24 : vector<8x128xi32>
    %26 = arith.maximumf %22, %23 : vector<8x128xf32>
    %27 = arith.select %25, %26, %22 : vector<8x128xi1>, vector<8x128xf32>
    %c16_i32 = arith.constant 16 : i32
    %28 = tpu.dynamic_rotate %27 by %c16_i32 dim 1 : vector<8x128xf32>, i32 -> vector<8x128xf32>
    %c16_i32_7 = arith.constant 16 : i32
    %29 = vector.broadcast %c16_i32_7 : i32 to vector<8x128xi32>
    %30 = arith.cmpi sge, %2, %29 : vector<8x128xi32>
    %31 = arith.maximumf %27, %28 : vector<8x128xf32>
    %32 = arith.select %30, %31, %27 : vector<8x128xi1>, vector<8x128xf32>
    %c32_i32 = arith.constant 32 : i32
    %33 = tpu.dynamic_rotate %32 by %c32_i32 dim 1 : vector<8x128xf32>, i32 -> vector<8x128xf32>
    %c32_i32_8 = arith.constant 32 : i32
    %34 = vector.broadcast %c32_i32_8 : i32 to vector<8x128xi32>
    %35 = arith.cmpi sge, %2, %34 : vector<8x128xi32>
    %36 = arith.maximumf %32, %33 : vector<8x128xf32>
    %37 = arith.select %35, %36, %32 : vector<8x128xi1>, vector<8x128xf32>
    %c64_i32 = arith.constant 64 : i32
    %38 = tpu.dynamic_rotate %37 by %c64_i32 dim 1 : vector<8x128xf32>, i32 -> vector<8x128xf32>
    %c64_i32_9 = arith.constant 64 : i32
    %39 = vector.broadcast %c64_i32_9 : i32 to vector<8x128xi32>
    %40 = arith.cmpi sge, %2, %39 : vector<8x128xi32>
    %41 = arith.maximumf %37, %38 : vector<8x128xf32>
    %42 = arith.select %40, %41, %37 : vector<8x128xi1>, vector<8x128xf32>
    %cst_10 = arith.constant 1.000000e+00 : f32
    %43 = vector.broadcast %cst_10 : f32 to vector<8x128xf32>
    %44 = arith.maximumf %42, %43 : vector<8x128xf32>
    %45 = arith.addf %3, %44 : vector<8x128xf32>
    %c0_i32 = arith.constant 0 : i32
    %46 = vector.broadcast %c0_i32 : i32 to vector<8x128xi32>
    %47 = arith.cmpi eq, %2, %46 : vector<8x128xi32>
    %c1_i32_11 = arith.constant 1 : i32
    %48 = tpu.dynamic_rotate %45 by %c1_i32_11 dim 1 : vector<8x128xf32>, i32 -> vector<8x128xf32>
    %cst_12 = arith.constant 0.000000e+00 : f32
    %49 = vector.broadcast %cst_12 : f32 to vector<8x128xf32>
    %50 = arith.select %47, %49, %48 : vector<8x128xi1>, vector<8x128xf32>
    %51 = arith.subf %45, %50 : vector<8x128xf32>
    %52 = math.log %51 : vector<8x128xf32>
    %cst_13 = arith.constant 2.000000e+00 : f32
    %53 = math.log %cst_13 : f32
    %54 = vector.broadcast %53 : f32 to vector<8x128xf32>
    %55 = arith.divf %52, %54 : vector<8x128xf32>
    %56 = vector.broadcast %1 : vector<8x1xi32> to vector<8x128xi32>
    %57 = arith.cmpi slt, %2, %56 : vector<8x128xi32>
    %cst_14 = arith.constant 0.000000e+00 : f32
    %58 = vector.broadcast %cst_14 : f32 to vector<8x128xf32>
    %59 = arith.select %57, %55, %58 : vector<8x128xi1>, vector<8x128xf32>
    %c0_15 = arith.constant 0 : index
    %c0_16 = arith.constant 0 : index
    %60 = vector.load %arg3[%c0_15, %c0_16] : memref<8x128xf32, #tpu.memory_space<vmem>>, vector<8x128xf32>
    tpu.vector_store %arg3[%c0_15, %c0_16], %59 {strides = array<i32>} : memref<8x128xf32, #tpu.memory_space<vmem>>, vector<8x128xf32>,
    return
  }
  func.func @transform_0(%arg0: i32) -> (i32, i32) {
    %c0_i32 = arith.constant 0 : i32
    %c0_i32_0 = arith.constant 0 : i32
    return %arg0, %c0_i32 : i32, i32
  }
  func.func @transform_1(%arg0: i32) -> (i32, i32) {
    %c0_i32 = arith.constant 0 : i32
    %c0_i32_0 = arith.constant 0 : i32
    return %arg0, %c0_i32 : i32, i32
  }
  func.func @transform_2(%arg0: i32) -> (i32, i32) {
    %c0_i32 = arith.constant 0 : i32
    %c0_i32_0 = arith.constant 0 : i32
    return %arg0, %c0_i32 : i32, i32
  }
}

</mosaic_0001>

<llo_original>
// kernel: _extract_durations.1
$region0: #{_extract_durations.1}
  #allocation0 [shape = 'u32[]', space=smem, size = 0x4, offset = 0x4, fixed_abs, tag = 'smem constant byte address 0x4 - core index']
  #allocation1 [shape = 'u32[144,128]{1,0:T(1,128)}', space=vmem, size = 0x12000, scoped, tag = 'internal scratch']
  %s0 = inlined_call_operand.vmem [shape: f32[8,128], index: 0, kind: input, shape index: {}]
  %s1 = inlined_call_operand.vmem [shape: s32[8,1], index: 1, kind: input, shape index: {}]
  %s2 = inlined_call_operand.vmem [shape: f32[8,128], index: 2, kind: output, shape index: {}]
  %s3 = sld [smem:[#allocation0]]
  $region18: #{_extract_durations.1} parent=0
    _
  %s5 = ssub.s32 1, %s3
  %s6 = scalar_select 0, %s5, %s3
  // Predicated region
  $region2: #{_extract_durations.1} parent=0 // pred_check
    _
  $region3: #{_extract_durations.1} parent=0 // pred_check_branch
    %8 = sbr.rel (0) target = $region5
  $region4: #{_extract_durations.1} parent=0 // pred_region
    _
  $region5: #{_extract_durations.1} parent=0 // pred_fallthru
    _
  // Predicated region
  $region6: #{_extract_durations.1} parent=0 // pred_check
    _
  $region7: #{_extract_durations.1} parent=0 // pred_check_branch
    %10 = sbr.rel (0) target = $region9
  $region8: #{_extract_durations.1} parent=0 // pred_region
    _
  $region9: #{_extract_durations.1} parent=0 // pred_fallthru
    _
  %v11 = vld [vmem:[%s0] sm:$0xff]
  %v12 = vld [vmem:[%s1] sm:$0xff]
  %v13 = vlaneseq
  %v14 = vand.u32 %v13, 127
  %v15 = vcvt.s32.f32 %v14
  %v16 = vmul.f32 %v11, 40.0
  %v17 = vfloor.f32 %v16
  %v18 = vsub.f32 %v17, %v15
  %19 = vrot.lane.b32.xlu0 %v18, 1
  %v20 = vpop.permute.xlu0 %19
  %vm21 = vcmp.ge.s32.totalorder %v14, 1
  %v22 = vmax.f32 %v18, %v20
  %v23 = vsel %vm21, %v22, %v18
  %24 = vrot.lane.b32.xlu0 %v23, 2
  %v25 = vpop.permute.xlu0 %24
  %vm26 = vcmp.ge.s32.totalorder %v14, 2
  %v27 = vmax.f32 %v23, %v25
  %v28 = vsel %vm26, %v27, %v23
  %29 = vrot.lane.b32.xlu0 %v28, 4
  %v30 = vpop.permute.xlu0 %29
  %vm31 = vcmp.ge.s32.totalorder %v14, 4
  %v32 = vmax.f32 %v28, %v30
  %v33 = vsel %vm31, %v32, %v28
  %34 = vrot.lane.b32.xlu0 %v33, 8
  %v35 = vpop.permute.xlu0 %34
  %vm36 = vcmp.ge.s32.totalorder %v14, 8
  %v37 = vmax.f32 %v33, %v35
  %v38 = vsel %vm36, %v37, %v33
  %39 = vrot.lane.b32.xlu0 %v38, 16
  %v40 = vpop.permute.xlu0 %39
  %vm41 = vcmp.ge.s32.totalorder %v14, 16
  %v42 = vmax.f32 %v38, %v40
  %v43 = vsel %vm41, %v42, %v38
  %44 = vrot.lane.b32.xlu0 %v43, 32
  %v45 = vpop.permute.xlu0 %44
  %vm46 = vcmp.ge.s32.totalorder %v14, 32
  %v47 = vmax.f32 %v43, %v45
  %v48 = vsel %vm46, %v47, %v43
  %49 = vrot.lane.b32.xlu0 %v48, 64
  %v50 = vpop.permute.xlu0 %49
  %vm51 = vcmp.ge.s32.totalorder %v14, 64
  %v52 = vmax.f32 %v48, %v50
  %v53 = vsel %vm51, %v52, %v48
  %v54 = vmax.f32 %v53, 1.0
  %v55 = vadd.f32 %v15, %v54
  %vm56 = vcmp.eq.s32.totalorder %v14, 0
  %57 = vrot.lane.b32.xlu0 %v55, 1
  %v58 = vpop.permute.xlu0 %57
  %v59 = vsel %vm56, 0.0, %v58
  %v60 = vsub.f32 %v55, %v59
  %v61 = vlog2.pop %v60
  %v62 = vmul.f32 %v61, 0.6931472
  %v63 = vrcp.pop 0.6931472
  %v64 = vmul.f32 %v62, %v63
  %65 = vset.pattern.permute.xlu0 0
  %66 = vperm.xlu0 %65, %v12
  %v67 = vpop.permute.xlu0 %66
  %vm68 = vcmp.lt.s32.totalorder %v14, %v67
  %v69 = vsel %vm68, %v64, 0.0
  %70 = vst [vmem:[%s2] sm:$0xff] %v69
  // Predicated region
  $region10: #{_extract_durations.1} parent=0 // pred_check
    _
  $region11: #{_extract_durations.1} parent=0 // pred_check_branch
    %72 = sbr.rel (0) target = $region13
  $region12: #{_extract_durations.1} parent=0 // pred_region
    _
  $region13: #{_extract_durations.1} parent=0 // pred_fallthru
    _
  // Predicated region
  $region14: #{_extract_durations.1} parent=0 // pred_check
    _
  $region15: #{_extract_durations.1} parent=0 // pred_check_branch
    %74 = sbr.rel (0) target = $region17
  $region16: #{_extract_durations.1} parent=0 // pred_region
    _
  $region17: #{_extract_durations.1} parent=0 // pred_fallthru
    _

</llo_original>
